<compile_context>
chip_gen: v5e
topology: v5e:2x2
jax: 0.10.0
libtpu: 0.0.40
codegen_flags: <defaults>
</compile_context>

<pallas_src>
import functools

import jax
import jax.numpy as jnp
from jax.experimental import pallas as pl
from jax.experimental.pallas import tpu as pltpu


def _round_up(x, m):
    return ((x + m - 1) // m) * m


def _vmem_cap_bytes():
    """Physical VMEM per TensorCore; conservative fallback = v7x (64 MiB)."""
    try:
        info = pltpu.get_tpu_info()
        cap = getattr(info, "vmem_capacity_bytes", None)
        if cap:
            return int(cap)
    except Exception:
        pass
    return 64 * 1024 * 1024


def _make_kernel(kh, kw, c_in, c_out, wp, dilation, tm, num_m):
    """Gated-conv kernel: implicit im2col into VMEM scratch + one fused dot."""
    # Static flat-index offset of each tap inside the flattened (Hp*Wp) image.
    offsets = [ki * dilation * wp + kj * dilation
               for ki in range(kh) for kj in range(kw)]

    def kernel(x_ref, wt_ref, b_ref, o_ref, xs_ref):
        # x_ref : (1, c_in, l_ext)        whole padded image of batch b (VMEM resident)
        # wt_ref: (2*c_out, kh*kw*c_in)   fused h|g weights, K = (ki, kj, c)
        # b_ref : (2*c_out, 1)            fused f32 biases
        # o_ref : (1, c_out, tm)          lane-dense output tile (M on the lane axis)
        # xs_ref: (kh*kw*c_in, tm)        im2col scratch (compute dtype)
        if num_m > 1:
            m0 = pl.multiple_of(pl.program_id(1) * tm, 128)
        else:
            m0 = 0  # static -> every slice below is a static slice

        # Implicit im2col: one statically-offset slice per tap.  Each write
        # lands on rows [t*c_in, (t+1)*c_in) of the scratch (sublane-aligned
        # whenever c_in % 8 == 0; masked sublane stores otherwise).
        for t, off in enumerate(offsets):
            xs_ref[pl.ds(t * c_in, c_in), :] = x_ref[0, :, pl.ds(m0 + off, tm)]

        # ONE fused MXU matmul with K = kh*kw*c_in, f32 accumulation.
        acc = jnp.dot(wt_ref[...], xs_ref[...],
                      preferred_element_type=jnp.float32)
        acc = acc + b_ref[...]                       # (2*c_out, 1) broadcast, f32 epilogue
        h = acc[:c_out, :]
        g = acc[c_out:, :]
        # activation is None in the reference module -> h is used as-is.
        o_ref[0] = (h * jax.nn.sigmoid(g)).astype(o_ref.dtype)

    return kernel


@functools.partial(jax.jit, static_argnames=("stride", "padding", "dilation",
                                              "compute_dtype", "tm_cap"))
def gated_conv2d(x, w_h, b_h, w_g, b_g, *, stride=1, padding=0, dilation=1,
                 compute_dtype=jnp.bfloat16, tm_cap=1024):
    """x: (N, C_in, H, W); w_*: (kh, kw, C_in, C_out) [HWIO]; b_*: (C_out,)."""
    kh, kw, c_in, c_out = w_h.shape
    n, _, hgt, wdt = x.shape
    out_dtype = x.dtype

    hp = hgt + 2 * padding
    wp_true = wdt + 2 * padding
    # Lane-align the row pitch when the inflation is modest (<= 25%): the
    # ki*wp part of every tap offset becomes a multiple of 128 (only the
    # kj*dilation shifts remain unaligned).  Small images keep the true pitch.
    wp = _round_up(wp_true, 128) if _round_up(wp_true, 128) * 4 <= wp_true * 5 else wp_true

    # Kernel computes the stride-1 output; stride > 1 is sub-sampled after.
    h_out1 = hp - dilation * (kh - 1)
    w_out1 = wp_true - dilation * (kw - 1)

    # --- wrapper plumbing: pad + flatten + cast only (no HBM im2col) ---
    x_pad = jnp.pad(x, ((0, 0), (0, 0), (padding, padding),
                        (padding, padding + (wp - wp_true))))
    x_flat = x_pad.reshape(n, c_in, hp * wp).astype(compute_dtype)

    m_img = h_out1 * wp                    # one "virtual" output row per padded row
    tm = min(_round_up(m_img, 128), _round_up(tm_cap, 128))
    if n == 1 and m_img > 128:
        # Keep >= 2 parallel grid steps so both v7x TensorCores get work.
        tm = min(tm, _round_up(pl.cdiv(m_img, 2), 128))
    num_m = pl.cdiv(m_img, tm)
    m_pad = num_m * tm
    max_off = dilation * ((kh - 1) * wp + (kw - 1))
    l_ext = m_pad + max_off                # tail zero-pad so every tap slice is in-bounds
    x_flat = jnp.pad(x_flat, ((0, 0), (0, 0), (0, l_ext - hp * wp)))
    # TODO(synk): for very large feature maps (c_in*l_ext beyond the VMEM
    # budget, esp. v7x 64 MiB), band the resident strip with a max_off halo
    # via manual make_async_copy double-buffering instead of whole-image
    # residency; and for tiny images fold several batch images per grid step.

    # Fused weights: (2*C_out, kh*kw*c_in); K ordering (ki, kj, c) matches the
    # scratch layout.  Output rows [0:c_out]=h, [c_out:]=g.
    k_tot = kh * kw * c_in
    w_cat = jnp.concatenate([w_h, w_g], axis=-1)                  # (kh, kw, c_in, 2*C_out)
    wt = w_cat.reshape(k_tot, 2 * c_out).T.astype(compute_dtype)  # (2*C_out, k_tot)
    b_cat = jnp.concatenate([b_h, b_g]).astype(jnp.float32).reshape(2 * c_out, 1)

    # Explicit VMEM budget (double-buffered x strip + weights + out tile + scratch).
    itm_c = jnp.dtype(compute_dtype).itemsize
    itm_o = jnp.dtype(out_dtype).itemsize
    need = (2 * c_in * l_ext * itm_c
            + 2 * (2 * c_out) * k_tot * itm_c
            + 2 * (2 * c_out) * 4
            + 2 * c_out * tm * itm_o
            + k_tot * tm * itm_c)
    cap = _vmem_cap_bytes()
    vmem_limit = max(32 << 20, min(int(need * 5 // 4) + (2 << 20), cap - (8 << 20)))

    kernel = _make_kernel(kh, kw, c_in, c_out, wp, dilation, tm, num_m)

    out = pl.pallas_call(
        kernel,
        out_shape=jax.ShapeDtypeStruct((n, c_out, m_pad), out_dtype),
        grid_spec=pltpu.PrefetchScalarGridSpec(
            num_scalar_prefetch=0,
            grid=(n, num_m),
            in_specs=[
                # whole flattened padded image of batch b (resident across the m axis)
                pl.BlockSpec((1, c_in, l_ext), lambda b, m: (b, 0, 0)),
                pl.BlockSpec((2 * c_out, k_tot), lambda b, m: (0, 0)),
                pl.BlockSpec((2 * c_out, 1), lambda b, m: (0, 0)),
            ],
            out_specs=pl.BlockSpec((1, c_out, tm), lambda b, m: (b, 0, m)),
            scratch_shapes=[pltpu.VMEM((k_tot, tm), compute_dtype)],
        ),
        compiler_params=pltpu.CompilerParams(
            dimension_semantics=("parallel", "parallel"),
            vmem_limit_bytes=vmem_limit),
    )(x_flat, wt, b_cat)

    # (N, C_out, M_pad) -> drop garbage tail -> (N, C_out, H_out1, Wp) -> trim cols.
    out = out[:, :, :m_img].reshape(n, c_out, h_out1, wp)[:, :, :, :w_out1]
    if stride != 1:
        # TODO(synk): move the sub-sampling into the kernel (strided pl.ds on
        # the lane axis + per-row output mapping) to avoid computing/writing
        # the full stride-1 output.
        out = out[:, :, ::stride, ::stride]
    return out


def _ref_conv(x, w, b, stride, padding, dilation):
    out = jax.lax.conv_general_dilated(
        x, w,
        window_strides=(stride, stride),
        padding=((padding, padding), (padding, padding)),
        rhs_dilation=(dilation, dilation),
        dimension_numbers=("NCHW", "HWIO", "NCHW"))
    return out + b.reshape(1, -1, 1, 1)


if __name__ == "__main__":
    # GatedConv2d(input_channels=4, output_channels=8, kernel_size=3,
    #             stride=1, padding=1, dilation=1, activation=None)
    N, C_IN, H, W = 2, 4, 16, 16
    C_OUT, KSIZE, STRIDE, PAD, DIL = 8, 3, 1, 1, 1

    key = jax.random.PRNGKey(0)
    kx, kwh, kbh, kwg, kbg = jax.random.split(key, 5)

    x = jax.random.normal(kx, (N, C_IN, H, W), dtype=jnp.float32)
    fan_in = C_IN * KSIZE * KSIZE
    bound = 1.0 / (fan_in ** 0.5)
    w_h = jax.random.uniform(kwh, (KSIZE, KSIZE, C_IN, C_OUT), jnp.float32, -bound, bound)
    b_h = jax.random.uniform(kbh, (C_OUT,), jnp.float32, -bound, bound)
    w_g = jax.random.uniform(kwg, (KSIZE, KSIZE, C_IN, C_OUT), jnp.float32, -bound, bound)
    b_g = jax.random.uniform(kbg, (C_OUT,), jnp.float32, -bound, bound)

    # Pure-JAX reference of the gated-conv semantics.
    h_ref = _ref_conv(x, w_h, b_h, STRIDE, PAD, DIL)
    g_ref = jax.nn.sigmoid(_ref_conv(x, w_g, b_g, STRIDE, PAD, DIL))
    ref = h_ref * g_ref

    # Exact-math check: f32 MXU path.
    out_f32 = gated_conv2d(x, w_h, b_h, w_g, b_g, stride=STRIDE, padding=PAD,
                           dilation=DIL, compute_dtype=jnp.float32)
    out_f32 = jax.block_until_ready(out_f32)
    assert out_f32.shape == (N, C_OUT, H, W), out_f32.shape
    assert jnp.allclose(out_f32, ref, atol=1e-4, rtol=1e-4), \
        float(jnp.max(jnp.abs(out_f32 - ref)))

    # Default fast path: bf16 operands, f32 accumulation + f32 epilogue.
    out_bf16 = gated_conv2d(x, w_h, b_h, w_g, b_g, stride=STRIDE, padding=PAD, dilation=DIL)
    out_bf16 = jax.block_until_ready(out_bf16)
    assert out_bf16.shape == (N, C_OUT, H, W), out_bf16.shape
    assert jnp.allclose(out_bf16, ref, atol=3e-2, rtol=3e-2), \
        float(jnp.max(jnp.abs(out_bf16 - ref)))

    print("KERNEL_OK")
</pallas_src>

<mosaic_0001>
module attributes {stable_mosaic.version = 11 : i64} {
  func.func @kernel(%arg0: i32, %arg1: i32, %arg2: memref<1x4x422xf32, #tpu.memory_space<vmem>>, %arg3: memref<16x36xf32, #tpu.memory_space<vmem>>, %arg4: memref<16x1xf32, #tpu.memory_space<vmem>>, %arg5: memref<1x8x384xf32, #tpu.memory_space<vmem>>, %arg6: memref<36x384xf32, #tpu.memory_space<vmem>>) attributes {dimension_semantics = [#tpu.dimension_semantics<parallel>, #tpu.dimension_semantics<parallel>], iteration_bounds = array<i64: 2, 1>, scalar_prefetch = 0 : i64, scratch_operands = 1 : i64, tpu.core_type = #tpu.core_type<tc>, window_params = [{transform_indices = @transform_0, window_bounds = array<i64: 1, 4, 422>}, {pipeline_mode = #tpu.pipeline_mode<synchronous>, transform_indices = @transform_1, window_bounds = array<i64: 16, 36>}, {pipeline_mode = #tpu.pipeline_mode<synchronous>, transform_indices = @transform_2, window_bounds = array<i64: 16, 1>}, {transform_indices = @transform_3, window_bounds = array<i64: 1, 8, 384>}]} {
    %c0 = arith.constant 0 : index
    %c0_0 = arith.constant 0 : index
    %c0_1 = arith.constant 0 : index
    %0 = vector.load %arg2[%c0, %c0_0, %c0_1] : memref<1x4x422xf32, #tpu.memory_space<vmem>>, vector<1x4x384xf32>
    %1 = vector.shape_cast %0 : vector<1x4x384xf32> to vector<4x384xf32>
    %c0_2 = arith.constant 0 : index
    %c0_3 = arith.constant 0 : index
    %2 = vector.load %arg6[%c0_2, %c0_3] : memref<36x384xf32, #tpu.memory_space<vmem>>, vector<4x384xf32>
    tpu.vector_store %arg6[%c0_2, %c0_3], %1 {strides = array<i32>} : memref<36x384xf32, #tpu.memory_space<vmem>>, vector<4x384xf32>,
    %c0_4 = arith.constant 0 : index
    %c0_5 = arith.constant 0 : index
    %c1 = arith.constant 1 : index
    %3 = vector.load %arg2[%c0_4, %c0_5, %c1] : memref<1x4x422xf32, #tpu.memory_space<vmem>>, vector<1x4x384xf32>
    %4 = vector.shape_cast %3 : vector<1x4x384xf32> to vector<4x384xf32>
    %c4 = arith.constant 4 : index
    %c0_6 = arith.constant 0 : index
    %5 = vector.load %arg6[%c4, %c0_6] : memref<36x384xf32, #tpu.memory_space<vmem>>, vector<4x384xf32>
    tpu.vector_store %arg6[%c4, %c0_6], %4 {strides = array<i32>} : memref<36x384xf32, #tpu.memory_space<vmem>>, vector<4x384xf32>,
    %c0_7 = arith.constant 0 : index
    %c0_8 = arith.constant 0 : index
    %c2 = arith.constant 2 : index
    %6 = vector.load %arg2[%c0_7, %c0_8, %c2] : memref<1x4x422xf32, #tpu.memory_space<vmem>>, vector<1x4x384xf32>
    %7 = vector.shape_cast %6 : vector<1x4x384xf32> to vector<4x384xf32>
    %c8 = arith.constant 8 : index
    %c0_9 = arith.constant 0 : index
    %8 = vector.load %arg6[%c8, %c0_9] : memref<36x384xf32, #tpu.memory_space<vmem>>, vector<4x384xf32>
    tpu.vector_store %arg6[%c8, %c0_9], %7 {strides = array<i32>} : memref<36x384xf32, #tpu.memory_space<vmem>>, vector<4x384xf32>,
    %c0_10 = arith.constant 0 : index
    %c0_11 = arith.constant 0 : index
    %c18 = arith.constant 18 : index
    %9 = vector.load %arg2[%c0_10, %c0_11, %c18] : memref<1x4x422xf32, #tpu.memory_space<vmem>>, vector<1x4x384xf32>
    %10 = vector.shape_cast %9 : vector<1x4x384xf32> to vector<4x384xf32>
    %c12 = arith.constant 12 : index
    %c0_12 = arith.constant 0 : index
    %11 = vector.load %arg6[%c12, %c0_12] : memref<36x384xf32, #tpu.memory_space<vmem>>, vector<4x384xf32>
    tpu.vector_store %arg6[%c12, %c0_12], %10 {strides = array<i32>} : memref<36x384xf32, #tpu.memory_space<vmem>>, vector<4x384xf32>,
    %c0_13 = arith.constant 0 : index
    %c0_14 = arith.constant 0 : index
    %c19 = arith.constant 19 : index
    %12 = vector.load %arg2[%c0_13, %c0_14, %c19] : memref<1x4x422xf32, #tpu.memory_space<vmem>>, vector<1x4x384xf32>
    %13 = vector.shape_cast %12 : vector<1x4x384xf32> to vector<4x384xf32>
    %c16 = arith.constant 16 : index
    %c0_15 = arith.constant 0 : index
    %14 = vector.load %arg6[%c16, %c0_15] : memref<36x384xf32, #tpu.memory_space<vmem>>, vector<4x384xf32>
    tpu.vector_store %arg6[%c16, %c0_15], %13 {strides = array<i32>} : memref<36x384xf32, #tpu.memory_space<vmem>>, vector<4x384xf32>,
    %c0_16 = arith.constant 0 : index
    %c0_17 = arith.constant 0 : index
    %c20 = arith.constant 20 : index
    %15 = vector.load %arg2[%c0_16, %c0_17, %c20] : memref<1x4x422xf32, #tpu.memory_space<vmem>>, vector<1x4x384xf32>
    %16 = vector.shape_cast %15 : vector<1x4x384xf32> to vector<4x384xf32>
    %c20_18 = arith.constant 20 : index
    %c0_19 = arith.constant 0 : index
    %17 = vector.load %arg6[%c20_18, %c0_19] : memref<36x384xf32, #tpu.memory_space<vmem>>, vector<4x384xf32>
    tpu.vector_store %arg6[%c20_18, %c0_19], %16 {strides = array<i32>} : memref<36x384xf32, #tpu.memory_space<vmem>>, vector<4x384xf32>,
    %c0_20 = arith.constant 0 : index
    %c0_21 = arith.constant 0 : index
    %c36 = arith.constant 36 : index
    %18 = vector.load %arg2[%c0_20, %c0_21, %c36] : memref<1x4x422xf32, #tpu.memory_space<vmem>>, vector<1x4x384xf32>
    %19 = vector.shape_cast %18 : vector<1x4x384xf32> to vector<4x384xf32>
    %c24 = arith.constant 24 : index
    %c0_22 = arith.constant 0 : index
    %20 = vector.load %arg6[%c24, %c0_22] : memref<36x384xf32, #tpu.memory_space<vmem>>, vector<4x384xf32>
    tpu.vector_store %arg6[%c24, %c0_22], %19 {strides = array<i32>} : memref<36x384xf32, #tpu.memory_space<vmem>>, vector<4x384xf32>,
    %c0_23 = arith.constant 0 : index
    %c0_24 = arith.constant 0 : index
    %c37 = arith.constant 37 : index
    %21 = vector.load %arg2[%c0_23, %c0_24, %c37] : memref<1x4x422xf32, #tpu.memory_space<vmem>>, vector<1x4x384xf32>
    %22 = vector.shape_cast %21 : vector<1x4x384xf32> to vector<4x384xf32>
    %c28 = arith.constant 28 : index
    %c0_25 = arith.constant 0 : index
    %23 = vector.load %arg6[%c28, %c0_25] : memref<36x384xf32, #tpu.memory_space<vmem>>, vector<4x384xf32>
    tpu.vector_store %arg6[%c28, %c0_25], %22 {strides = array<i32>} : memref<36x384xf32, #tpu.memory_space<vmem>>, vector<4x384xf32>,
    %c0_26 = arith.constant 0 : index
    %c0_27 = arith.constant 0 : index
    %c38 = arith.constant 38 : index
    %24 = vector.load %arg2[%c0_26, %c0_27, %c38] : memref<1x4x422xf32, #tpu.memory_space<vmem>>, vector<1x4x384xf32>
    %25 = vector.shape_cast %24 : vector<1x4x384xf32> to vector<4x384xf32>
    %c32 = arith.constant 32 : index
    %c0_28 = arith.constant 0 : index
    %26 = vector.load %arg6[%c32, %c0_28] : memref<36x384xf32, #tpu.memory_space<vmem>>, vector<4x384xf32>
    tpu.vector_store %arg6[%c32, %c0_28], %25 {strides = array<i32>} : memref<36x384xf32, #tpu.memory_space<vmem>>, vector<4x384xf32>,
    %c0_29 = arith.constant 0 : index
    %c0_30 = arith.constant 0 : index
    %27 = vector.load %arg3[%c0_29, %c0_30] : memref<16x36xf32, #tpu.memory_space<vmem>>, vector<16x36xf32>
    %c0_31 = arith.constant 0 : index
    %c0_32 = arith.constant 0 : index
    %28 = vector.load %arg6[%c0_31, %c0_32] : memref<36x384xf32, #tpu.memory_space<vmem>>, vector<36x384xf32>
    %cst = arith.constant dense<0.000000e+00> : vector<16x384xf32>
    %29 = tpu.matmul %27, %28, %cst {dimension_numbers = #tpu.dot_dimension_numbers<[1], [0], [0], [1], [0, 0, 1, 1], [], []>} : vector<16x36xf32>, vector<36x384xf32>, vector<16x384xf32> -> vector<16x384xf32>
    %c0_33 = arith.constant 0 : index
    %c0_34 = arith.constant 0 : index
    %30 = vector.load %arg4[%c0_33, %c0_34] : memref<16x1xf32, #tpu.memory_space<vmem>>, vector<16x1xf32>
    %31 = vector.broadcast %30 : vector<16x1xf32> to vector<16x384xf32>
    %32 = arith.addf %29, %31 : vector<16x384xf32>
    %33 = vector.extract_strided_slice %32 {offsets = [0, 0], sizes = [8, 384], strides = [1, 1]} : vector<16x384xf32> to vector<8x384xf32>
    %34 = vector.extract_strided_slice %32 {offsets = [8, 0], sizes = [8, 384], strides = [1, 1]} : vector<16x384xf32> to vector<8x384xf32>
    %35 = arith.negf %34 : vector<8x384xf32>
    %36 = math.exp %35 : vector<8x384xf32>
    %cst_35 = arith.constant 1.000000e+00 : f32
    %37 = vector.broadcast %cst_35 : f32 to vector<8x384xf32>
    %38 = arith.addf %37, %36 : vector<8x384xf32>
    %39 = arith.divf %37, %38 : vector<8x384xf32>
    %40 = arith.mulf %33, %39 : vector<8x384xf32>
    %c0_36 = arith.constant 0 : index
    %c0_37 = arith.constant 0 : index
    %c0_38 = arith.constant 0 : index
    %41 = vector.load %arg5[%c0_36, %c0_37, %c0_38] : memref<1x8x384xf32, #tpu.memory_space<vmem>>, vector<1x8x384xf32>
    %42 = vector.shape_cast %41 : vector<1x8x384xf32> to vector<8x384xf32>
    %43 = vector.shape_cast %40 : vector<8x384xf32> to vector<1x8x384xf32>
    tpu.vector_store %arg5[%c0_36, %c0_37, %c0_38], %43 {strides = array<i32>} : memref<1x8x384xf32, #tpu.memory_space<vmem>>, vector<1x8x384xf32>,
    return
  }
  func.func @transform_0(%arg0: i32, %arg1: i32) -> (i32, i32, i32) {
    %c0_i32 = arith.constant 0 : i32
    %c0_i32_0 = arith.constant 0 : i32
    %c0_i32_1 = arith.constant 0 : i32
    return %arg0, %c0_i32, %c0_i32_0 : i32, i32, i32
  }
  func.func @transform_1(%arg0: i32, %arg1: i32) -> (i32, i32) {
    %c0_i32 = arith.constant 0 : i32
    %c0_i32_0 = arith.constant 0 : i32
    %c0_i32_1 = arith.constant 0 : i32
    return %c0_i32, %c0_i32_0 : i32, i32
  }
  func.func @transform_2(%arg0: i32, %arg1: i32) -> (i32, i32) {
    %c0_i32 = arith.constant 0 : i32
    %c0_i32_0 = arith.constant 0 : i32
    %c0_i32_1 = arith.constant 0 : i32
    return %c0_i32, %c0_i32_0 : i32, i32
  }
  func.func @transform_3(%arg0: i32, %arg1: i32) -> (i32, i32, i32) {
    %c0_i32 = arith.constant 0 : i32
    %c0_i32_0 = arith.constant 0 : i32
    return %arg0, %c0_i32, %arg1 : i32, i32, i32
  }
}

</mosaic_0001>

<llo_original>
// kernel: gated_conv2d.1
$region0: #{gated_conv2d.1}
  #allocation0 [shape = 'u32[]', space=smem, size = 0x4, offset = 0x4, fixed_abs, tag = 'smem constant byte address 0x4 - core index']
  #allocation1 [shape = 'u32[72,128]{1,0:T(1,128)}', space=vmem, size = 0x9000, scoped, tag = 'internal scratch']
  #allocation2 [shape = 'f32[36,384]{1,0:T(8,128)}', space=vmem, size = 0xf000, scoped, tag = 'scratch operand']
  %s0 = inlined_call_operand.vmem [shape: f32[2,4,422], index: 0, kind: input, shape index: {}]
  %s1 = inlined_call_operand.vmem [shape: f32[16,36], index: 1, kind: input, shape index: {}]
  %s2 = inlined_call_operand.vmem [shape: f32[16,1], index: 2, kind: input, shape index: {}]
  %s3 = inlined_call_operand.vmem [shape: f32[2,8,384], index: 3, kind: output, shape index: {}]
  %s4 = sld [smem:[#allocation0]]
  $region45: #{gated_conv2d.1} parent=0
    _
  %s6 = ssub.s32 1, %s4
  %s7 = scalar_select 0, %s6, %s4
  loop: start=0, step=1, limit=4
  $region2: #{gated_conv2d.1} parent=0 // loop_pre_header
    _
  $region3: #{gated_conv2d.1} parent=0 // loop_header
    %s9 = sphi 0, %s13
    %p10 = scmp.ge.s32.totalorder %s9, 4
    %s16 = sphi 0, %s28
    %s17 = sphi 0, %s24
    %s18 = sphi 0, %s16
    %s19 = sphi 0, %s17
    %s20 = sphi 0, %s18
    %s21 = sphi 0, %s19
    %s31 = sphi 0, %s33
    %s34 = sphi 0, %s31
    %s35 = sphi 0, %s34
    %s51 = sphi 0, %s35
    %s55 = sphi 0, %s55
    %s57 = sphi 0, %s55
    %s58 = sphi 0, %s57
    %s72 = sphi 0, %s58
    %s76 = sphi 0, %s76
    %s78 = sphi 0, %s76
    %s79 = sphi 0, %s78
    %s93 = sphi 0, %s79
    %s101 = sphi 0, %s103
    %s104 = sphi 0, %s101
    %s105 = sphi 0, %s104
    %s121 = sphi 0, %s105
  $region4: #{gated_conv2d.1} parent=0 // loop_header_branch
    %12 = sbr.rel (%p10) target = $region8
  $region5: #{gated_conv2d.1} parent=0 // loop_body
    %s14 = ssub.s32 %s9, 1
    %s15 = ssub.s32 %s9, 2
    %s22 = sadd.s32 1, %s17
    %p23 = scmp.ge.s32.totalorder %s22, 1
    %s24 = scalar_select %p23, 0, %s22
    %s25 = sadd.s32 1, %s16
    %s26 = scalar_select %p23, %s25, %s16
    %p27 = scmp.ge.s32.totalorder %s26, 2
    %s28 = scalar_select %p27, 0, %s26
    %s29 = ssub.s32 %s16, %s28
    %p30 = scmp.eq.s32.totalorder %s29, 0
    %s32 = sadd.s32 %s31, 1
    %s33 = scalar_select %p30, %s31, %s32
    %p36 = pneg %p30
    %p37 = scmp.eq.s32.totalorder %s9, 1
    %p38 = por %p36, %p37
    %p39 = scmp.ne.s32.totalorder %s31, %s34
    %p40 = scmp.eq.s32.totalorder %s9, 0
    %p41 = por %p39, %p40
    %p42 = scmp.ne.s32.totalorder %s31, %s34
    %p43 = scmp.eq.s32.totalorder %s14, 1
    %p44 = por %p42, %p43
    %p45 = scmp.ne.s32.totalorder %s34, %s35
    %p46 = scmp.eq.s32.totalorder %s14, 0
    %p47 = por %p45, %p46
    %p48 = scmp.ne.s32.totalorder %s34, %s35
    %p49 = scmp.eq.s32.totalorder %s15, 1
    %p50 = por %p48, %p49
    %p52 = scmp.ne.s32.totalorder %s35, %s51
    %p53 = scmp.eq.s32.totalorder %s15, 0
    %p54 = por %p52, %p53
    %s56 = sadd.s32 %s55, 1
    %p59 = scmp.eq.s32.totalorder %s9, 1
    %p60 = scmp.ne.s32.totalorder %s55, %s57
    %p61 = scmp.eq.s32.totalorder %s9, 0
    %p62 = por %p60, %p61
    %p63 = scmp.ne.s32.totalorder %s55, %s57
    %p64 = scmp.eq.s32.totalorder %s14, 1
    %p65 = por %p63, %p64
    %p66 = scmp.ne.s32.totalorder %s57, %s58
    %p67 = scmp.eq.s32.totalorder %s14, 0
    %p68 = por %p66, %p67
    %p69 = scmp.ne.s32.totalorder %s57, %s58
    %p70 = scmp.eq.s32.totalorder %s15, 1
    %p71 = por %p69, %p70
    %p73 = scmp.ne.s32.totalorder %s58, %s72
    %p74 = scmp.eq.s32.totalorder %s15, 0
    %p75 = por %p73, %p74
    %s77 = sadd.s32 %s76, 1
    %p80 = scmp.eq.s32.totalorder %s9, 1
    %p81 = scmp.ne.s32.totalorder %s76, %s78
    %p82 = scmp.eq.s32.totalorder %s9, 0
    %p83 = por %p81, %p82
    %p84 = scmp.ne.s32.totalorder %s76, %s78
    %p85 = scmp.eq.s32.totalorder %s14, 1
    %p86 = por %p84, %p85
    %p87 = scmp.ne.s32.totalorder %s78, %s79
    %p88 = scmp.eq.s32.totalorder %s14, 0
    %p89 = por %p87, %p88
    %p90 = scmp.ne.s32.totalorder %s78, %s79
    %p91 = scmp.eq.s32.totalorder %s15, 1
    %p92 = por %p90, %p91
    %p94 = scmp.ne.s32.totalorder %s79, %s93
    %p95 = scmp.eq.s32.totalorder %s15, 0
    %p96 = por %p94, %p95
    %s97 = ssub.s32 %s16, %s28
    %s98 = ssub.s32 %s17, %s24
    %s99 = sor.u32 %s97, %s98
    %p100 = scmp.eq.s32.totalorder %s99, 0
    %s102 = sadd.s32 %s101, 1
    %s103 = scalar_select %p100, %s101, %s102
    %p106 = pneg %p100
    %p107 = scmp.eq.s32.totalorder %s9, 1
    %p108 = por %p106, %p107
    %p109 = scmp.ne.s32.totalorder %s101, %s104
    %p110 = scmp.eq.s32.totalorder %s9, 0
    %p111 = por %p109, %p110
    %p112 = scmp.ne.s32.totalorder %s101, %s104
    %p113 = scmp.eq.s32.totalorder %s14, 1
    %p114 = por %p112, %p113
    %p115 = scmp.ne.s32.totalorder %s104, %s105
    %p116 = scmp.eq.s32.totalorder %s14, 0
    %p117 = por %p115, %p116
    %p118 = scmp.ne.s32.totalorder %s104, %s105
    %p119 = scmp.eq.s32.totalorder %s15, 1
    %p120 = por %p118, %p119
    %p122 = scmp.ne.s32.totalorder %s105, %s121
    %p123 = scmp.eq.s32.totalorder %s15, 0
    %p124 = por %p122, %p123
    %p125 = scmp.le.s32.totalorder 1, %s9
    %p126 = scmp.lt.s32.totalorder %s9, 3
    %p127 = pnand %p125, %p126
    %p128 = pneg %p127
    // Predicated region
    $region9: #{gated_conv2d.1} parent=5 // pred_check
      _
    $region10: #{gated_conv2d.1} parent=5 // pred_check_branch
      %130 = sbr.rel (%p127) target = $region12
    $region11: #{gated_conv2d.1} parent=5 // pred_region
      %s131 = ssub.s32 %s9, 1
      // Predicated region
      $region13: #{gated_conv2d.1} parent=11 // pred_check
        %p132 = pneg %p68
      $region14: #{gated_conv2d.1} parent=11 // pred_check_branch
        %134 = sbr.rel (%p132) target = $region16
      $region15: #{gated_conv2d.1} parent=11 // pred_region
        _
      $region16: #{gated_conv2d.1} parent=11 // pred_fallthru
        _
      // Predicated region
      $region17: #{gated_conv2d.1} parent=11 // pred_check
        %p135 = pneg %p89
      $region18: #{gated_conv2d.1} parent=11 // pred_check_branch
        %137 = sbr.rel (%p135) target = $region20
      $region19: #{gated_conv2d.1} parent=11 // pred_region
        _
      $region20: #{gated_conv2d.1} parent=11 // pred_fallthru
        _
    $region12: #{gated_conv2d.1} parent=5 // pred_fallthru
      _
    %p138 = scmp.lt.s32.totalorder %s9, 2
    // Predicated region
    $region21: #{gated_conv2d.1} parent=5 // pred_check
      %p139 = pneg %p138
    $region22: #{gated_conv2d.1} parent=5 // pred_check_branch
      %141 = sbr.rel (%p139) target = $region24
    $region23: #{gated_conv2d.1} parent=5 // pred_region
      // Predicated region
      $region25: #{gated_conv2d.1} parent=23 // pred_check
        %p142 = pneg %p41
      $region26: #{gated_conv2d.1} parent=23 // pred_check_branch
        %144 = sbr.rel (%p142) target = $region28
      $region27: #{gated_conv2d.1} parent=23 // pred_region
        %p145 = scmp.lt.s32.totalorder %s16, 1
        %s146 = scalar_select %p145, %s16, 1
        %s147 = smul.addr %s146, 4
        %s148 = smul.addr %s147, 4
        %s149 = scalar_lea.vmem %s0, %s148
      $region28: #{gated_conv2d.1} parent=23 // pred_fallthru
        _
    $region24: #{gated_conv2d.1} parent=5 // pred_fallthru
      _
    %p150 = scmp.le.s32.totalorder 1, %s9
    %p151 = scmp.lt.s32.totalorder %s9, 3
    %p152 = pnand %p150, %p151
    %p153 = pneg %p152
    // Predicated region
    $region29: #{gated_conv2d.1} parent=5 // pred_check
      _
    $region30: #{gated_conv2d.1} parent=5 // pred_check_branch
      %155 = sbr.rel (%p152) target = $region32
    $region31: #{gated_conv2d.1} parent=5 // pred_region
      %s156 = ssub.s32 %s9, 1
      %p157 = scmp.lt.s32.totalorder %s18, 1
      %s158 = scalar_select %p157, %s18, 1
      %s159 = smul.addr %s158, 4
      %s160 = smul.addr %s159, 4
      %s161 = scalar_lea.vmem %s0, %s160
      %p162 = pneg %p47
      %p163 = pneg %p44
      %p164 = pneg %p68
      %p165 = pneg %p65
      %p166 = pneg %p89
      %p167 = pneg %p86
      %p168 = pneg %p117
      %p169 = pneg %p114
      %s170 = smul.u32 3, %s19
      %p171 = scmp.lt.s32.totalorder %s18, 1
      %s172 = scalar_select %p171, %s18, 1
      %p173 = scmp.lt.s32.totalorder %s170, 2
      %s174 = scalar_select %p173, %s170, 2
      %s175 = smul.addr %s172, 3
      %s176 = sadd.s32 %s174, %s175
      %s177 = smul.addr %s176, 8
      %s178 = scalar_lea.vmem %s3, %s177
      %p179 = scmp.lt.s32.totalorder %s18, 1
      %s180 = scalar_select %p179, %s18, 1
      %s181 = smul.addr %s180, 4
      %s182 = smul.addr %s181, 4
      %s183 = scalar_lea.vmem %s0, %s182
      %s184 = smul.u32 3, %s19
      %p185 = scmp.lt.s32.totalorder %s18, 1
      %s186 = scalar_select %p185, %s18, 1
      %p187 = scmp.lt.s32.totalorder %s184, 2
      %s188 = scalar_select %p187, %s184, 2
      %s189 = smul.addr %s186, 3
      %s190 = sadd.s32 %s188, %s189
      %s191 = smul.addr %s190, 8
      %s192 = scalar_lea.vmem %s3, %s191
      %s193 = smul.u32 3, %s19
      %v194 = vld [vmem:[%s183] sm:$0xff]
      %v195 = vld [vmem:[%s183 + $0x8] sm:$0xf]
      %198 = vst [vmem:[#allocation1] ss:$2 sm:$0xff] %v194
      %s199 = scalar_lea.vmem [#allocation1], 16
      %200 = vst [vmem:[%s199] ss:$2 sm:$0xff] %v195
      %v201 = vld.sshfl [vmem:[#allocation1] sm:$0xff pattern:$0x75316420]
      %v202 = vld.sshfl [vmem:[#allocation1 + $0x8] sm:$0xff pattern:$0x75316420]
      %v203 = vld.sshfl [vmem:[#allocation1 + $0x10] sm:$0xff pattern:$0x75316420]
      %207 = vst [vmem:[#allocation2] sm:$0xf] %v201
      %208 = vst [vmem:[#allocation2 + $0x8] sm:$0xf] %v202
      %209 = vst [vmem:[#allocation2 + $0x10] sm:$0xf] %v203
      %v210 = vld [vmem:[%s183] sm:$0xff]
      %v211 = vld [vmem:[%s183 + $0x8] sm:$0xff]
      %s214 = scalar_lea.vmem [#allocation1], 1
      %215 = vst [vmem:[%s214] ss:$2 sm:$0xff] %v210
      %s216 = scalar_lea.vmem [#allocation1], 17
      %217 = vst [vmem:[%s216] ss:$2 sm:$0xff] %v211
      %v218 = vld.sshfl [vmem:[#allocation1] sm:$0xff pattern:$0x75316420]
      %v219 = vld.sshfl [vmem:[#allocation1 + $0x8] sm:$0xff pattern:$0x75316420]
      %v220 = vld.sshfl [vmem:[#allocation1 + $0x10] sm:$0xff pattern:$0x75316420]
      %v221 = vld.sshfl [vmem:[#allocation1 + $0x18] sm:$0xff pattern:$0x75316420]
      %222 = vrot.lane.b32.xlu0 %v218, 127
      %v223 = vpop.permute.xlu0 %222
      %224 = vrot.lane.b32.xlu0 %v219, 127
      %v225 = vpop.permute.xlu0 %224
      %226 = vrot.lane.b32.xlu0 %v220, 127
      %v227 = vpop.permute.xlu0 %226
      %228 = vrot.lane.b32.xlu0 %v221, 127
      %v229 = vpop.permute.xlu0 %228
      %vm230 = vcmask 1039360
      %v231 = vsel %vm230, %v223, %v225
      %v232 = vsel %vm230, %v225, %v227
      %v233 = vsel %vm230, %v227, %v229
      %237 = vst [vmem:[#allocation2] sm:$0xf0] %v231
      %238 = vst [vmem:[#allocation2 + $0x8] sm:$0xf0] %v232
      %239 = vst [vmem:[#allocation2 + $0x10] sm:$0xf0] %v233
      %v240 = vld [vmem:[%s183] sm:$0xff]
      %v241 = vld [vmem:[%s183 + $0x8] sm:$0xff]
      %244 = vst [vmem:[#allocation1] ss:$2 sm:$0xff] %v240
      %s245 = scalar_lea.vmem [#allocation1], 16
      %246 = vst [vmem:[%s245] ss:$2 sm:$0xff] %v241
      %v247 = vld.sshfl [vmem:[#allocation1] sm:$0xff pattern:$0x75316420]
      %v248 = vld.sshfl [vmem:[#allocation1 + $0x8] sm:$0xff pattern:$0x75316420]
      %v249 = vld.sshfl [vmem:[#allocation1 + $0x10] sm:$0xff pattern:$0x75316420]
      %v250 = vld.sshfl [vmem:[#allocation1 + $0x18] sm:$0xff pattern:$0x75316420]
      %251 = vrot.lane.b32.xlu0 %v247, 126
      %v252 = vpop.permute.xlu0 %251
      %253 = vrot.lane.b32.xlu0 %v248, 126
      %v254 = vpop.permute.xlu0 %253
      %255 = vrot.lane.b32.xlu0 %v249, 126
      %v256 = vpop.permute.xlu0 %255
      %257 = vrot.lane.b32.xlu0 %v250, 126
      %v258 = vpop.permute.xlu0 %257
      %vm259 = vcmask 1031168
      %v260 = vsel %vm259, %v252, %v254
      %v261 = vsel %vm259, %v254, %v256
      %v262 = vsel %vm259, %v256, %v258
      %266 = vst [vmem:[#allocation2 + $0x18] sm:$0xf] %v260
      %267 = vst [vmem:[#allocation2 + $0x20] sm:$0xf] %v261
      %268 = vst [vmem:[#allocation2 + $0x28] sm:$0xf] %v262
      %v269 = vld [vmem:[%s183] sm:$0xff]
      %v270 = vld [vmem:[%s183 + $0x8] sm:$0xff]
      %s273 = scalar_lea.vmem [#allocation1], 1
      %274 = vst [vmem:[%s273] ss:$2 sm:$0xff] %v269
      %s275 = scalar_lea.vmem [#allocation1], 17
      %276 = vst [vmem:[%s275] ss:$2 sm:$0xff] %v270
      %v277 = vld.sshfl [vmem:[#allocation1] sm:$0xff pattern:$0x75316420]
      %v278 = vld.sshfl [vmem:[#allocation1 + $0x8] sm:$0xff pattern:$0x75316420]
      %v279 = vld.sshfl [vmem:[#allocation1 + $0x10] sm:$0xff pattern:$0x75316420]
      %v280 = vld.sshfl [vmem:[#allocation1 + $0x18] sm:$0xff pattern:$0x75316420]
      %281 = vrot.lane.b32.xlu0 %v277, 110
      %v282 = vpop.permute.xlu0 %281
      %283 = vrot.lane.b32.xlu0 %v278, 110
      %v284 = vpop.permute.xlu0 %283
      %285 = vrot.lane.b32.xlu0 %v279, 110
      %v286 = vpop.permute.xlu0 %285
      %287 = vrot.lane.b32.xlu0 %v280, 110
      %v288 = vpop.permute.xlu0 %287
      %vm289 = vcmask 900096
      %v290 = vsel %vm289, %v282, %v284
      %v291 = vsel %vm289, %v284, %v286
      %v292 = vsel %vm289, %v286, %v288
      %296 = vst [vmem:[#allocation2 + $0x18] sm:$0xf0] %v290
      %297 = vst [vmem:[#allocation2 + $0x20] sm:$0xf0] %v291
      %298 = vst [vmem:[#allocation2 + $0x28] sm:$0xf0] %v292
      %v299 = vld [vmem:[%s183] sm:$0xff]
      %v300 = vld [vmem:[%s183 + $0x8] sm:$0xff]
      %303 = vst [vmem:[#allocation1] ss:$2 sm:$0xff] %v299
      %s304 = scalar_lea.vmem [#allocation1], 16
      %305 = vst [vmem:[%s304] ss:$2 sm:$0xff] %v300
      %v306 = vld.sshfl [vmem:[#allocation1] sm:$0xff pattern:$0x75316420]
      %v307 = vld.sshfl [vmem:[#allocation1 + $0x8] sm:$0xff pattern:$0x75316420]
      %v308 = vld.sshfl [vmem:[#allocation1 + $0x10] sm:$0xff pattern:$0x75316420]
      %v309 = vld.sshfl [vmem:[#allocation1 + $0x18] sm:$0xff pattern:$0x75316420]
      %310 = vrot.lane.b32.xlu0 %v306, 109
      %v311 = vpop.permute.xlu0 %310
      %312 = vrot.lane.b32.xlu0 %v307, 109
      %v313 = vpop.permute.xlu0 %312
      %314 = vrot.lane.b32.xlu0 %v308, 109
      %v315 = vpop.permute.xlu0 %314
      %316 = vrot.lane.b32.xlu0 %v309, 109
      %v317 = vpop.permute.xlu0 %316
      %vm318 = vcmask 891904
      %v319 = vsel %vm318, %v311, %v313
      %v320 = vsel %vm318, %v313, %v315
      %v321 = vsel %vm318, %v315, %v317
      %325 = vst [vmem:[#allocation2 + $0x30] sm:$0xf] %v319
      %326 = vst [vmem:[#allocation2 + $0x38] sm:$0xf] %v320
      %327 = vst [vmem:[#allocation2 + $0x40] sm:$0xf] %v321
      %v328 = vld [vmem:[%s183] sm:$0xff]
      %v329 = vld [vmem:[%s183 + $0x8] sm:$0xff]
      %s332 = scalar_lea.vmem [#allocation1], 1
      %333 = vst [vmem:[%s332] ss:$2 sm:$0xff] %v328
      %s334 = scalar_lea.vmem [#allocation1], 17
      %335 = vst [vmem:[%s334] ss:$2 sm:$0xff] %v329
      %v336 = vld.sshfl [vmem:[#allocation1] sm:$0xff pattern:$0x75316420]
      %v337 = vld.sshfl [vmem:[#allocation1 + $0x8] sm:$0xff pattern:$0x75316420]
      %v338 = vld.sshfl [vmem:[#allocation1 + $0x10] sm:$0xff pattern:$0x75316420]
      %v339 = vld.sshfl [vmem:[#allocation1 + $0x18] sm:$0xff pattern:$0x75316420]
      %340 = vrot.lane.b32.xlu0 %v336, 108
      %v341 = vpop.permute.xlu0 %340
      %342 = vrot.lane.b32.xlu0 %v337, 108
      %v343 = vpop.permute.xlu0 %342
      %344 = vrot.lane.b32.xlu0 %v338, 108
      %v345 = vpop.permute.xlu0 %344
      %346 = vrot.lane.b32.xlu0 %v339, 108
      %v347 = vpop.permute.xlu0 %346
      %vm348 = vcmask 883712
      %v349 = vsel %vm348, %v341, %v343
      %v350 = vsel %vm348, %v343, %v345
      %v351 = vsel %vm348, %v345, %v347
      %355 = vst [vmem:[#allocation2 + $0x30] sm:$0xf0] %v349
      %356 = vst [vmem:[#allocation2 + $0x38] sm:$0xf0] %v350
      %357 = vst [vmem:[#allocation2 + $0x40] sm:$0xf0] %v351
      %v358 = vld [vmem:[%s183] sm:$0xff]
      %v359 = vld [vmem:[%s183 + $0x8] sm:$0xff]
      %362 = vst [vmem:[#allocation1] ss:$2 sm:$0xff] %v358
      %s363 = scalar_lea.vmem [#allocation1], 16
      %364 = vst [vmem:[%s363] ss:$2 sm:$0xff] %v359
      %v365 = vld.sshfl [vmem:[#allocation1] sm:$0xff pattern:$0x75316420]
      %v366 = vld.sshfl [vmem:[#allocation1 + $0x8] sm:$0xff pattern:$0x75316420]
      %v367 = vld.sshfl [vmem:[#allocation1 + $0x10] sm:$0xff pattern:$0x75316420]
      %v368 = vld.sshfl [vmem:[#allocation1 + $0x18] sm:$0xff pattern:$0x75316420]
      %369 = vrot.lane.b32.xlu0 %v365, 92
      %v370 = vpop.permute.xlu0 %369
      %371 = vrot.lane.b32.xlu0 %v366, 92
      %v372 = vpop.permute.xlu0 %371
      %373 = vrot.lane.b32.xlu0 %v367, 92
      %v374 = vpop.permute.xlu0 %373
      %375 = vrot.lane.b32.xlu0 %v368, 92
      %v376 = vpop.permute.xlu0 %375
      %vm377 = vcmask 752640
      %v378 = vsel %vm377, %v370, %v372
      %v379 = vsel %vm377, %v372, %v374
      %v380 = vsel %vm377, %v374, %v376
      %384 = vst [vmem:[#allocation2 + $0x48] sm:$0xf] %v378
      %385 = vst [vmem:[#allocation2 + $0x50] sm:$0xf] %v379
      %386 = vst [vmem:[#allocation2 + $0x58] sm:$0xf] %v380
      %v387 = vld [vmem:[%s183] sm:$0xff]
      %v388 = vld [vmem:[%s183 + $0x8] sm:$0xff]
      %s391 = scalar_lea.vmem [#allocation1], 1
      %392 = vst [vmem:[%s391] ss:$2 sm:$0xff] %v387
      %s393 = scalar_lea.vmem [#allocation1], 17
      %394 = vst [vmem:[%s393] ss:$2 sm:$0xff] %v388
      %v395 = vld.sshfl [vmem:[#allocation1] sm:$0xff pattern:$0x75316420]
      %v396 = vld.sshfl [vmem:[#allocation1 + $0x8] sm:$0xff pattern:$0x75316420]
      %v397 = vld.sshfl [vmem:[#allocation1 + $0x10] sm:$0xff pattern:$0x75316420]
      %v398 = vld.sshfl [vmem:[#allocation1 + $0x18] sm:$0xff pattern:$0x75316420]
      %399 = vrot.lane.b32.xlu0 %v395, 91
      %v400 = vpop.permute.xlu0 %399
      %401 = vrot.lane.b32.xlu0 %v396, 91
      %v402 = vpop.permute.xlu0 %401
      %403 = vrot.lane.b32.xlu0 %v397, 91
      %v404 = vpop.permute.xlu0 %403
      %405 = vrot.lane.b32.xlu0 %v398, 91
      %v406 = vpop.permute.xlu0 %405
      %vm407 = vcmask 744448
      %v408 = vsel %vm407, %v400, %v402
      %v409 = vsel %vm407, %v402, %v404
      %v410 = vsel %vm407, %v404, %v406
      %414 = vst [vmem:[#allocation2 + $0x48] sm:$0xf0] %v408
      %415 = vst [vmem:[#allocation2 + $0x50] sm:$0xf0] %v409
      %416 = vst [vmem:[#allocation2 + $0x58] sm:$0xf0] %v410
      %v417 = vld [vmem:[%s183] sm:$0xff]
      %v418 = vld [vmem:[%s183 + $0x8] sm:$0xff]
      %421 = vst [vmem:[#allocation1] ss:$2 sm:$0xff] %v417
      %s422 = scalar_lea.vmem [#allocation1], 16
      %423 = vst [vmem:[%s422] ss:$2 sm:$0xff] %v418
      %v424 = vld.sshfl [vmem:[#allocation1] sm:$0xff pattern:$0x75316420]
      %v425 = vld.sshfl [vmem:[#allocation1 + $0x8] sm:$0xff pattern:$0x75316420]
      %v426 = vld.sshfl [vmem:[#allocation1 + $0x10] sm:$0xff pattern:$0x75316420]
      %v427 = vld.sshfl [vmem:[#allocation1 + $0x18] sm:$0xff pattern:$0x75316420]
      %428 = vrot.lane.b32.xlu0 %v424, 90
      %v429 = vpop.permute.xlu0 %428
      %430 = vrot.lane.b32.xlu0 %v425, 90
      %v431 = vpop.permute.xlu0 %430
      %432 = vrot.lane.b32.xlu0 %v426, 90
      %v433 = vpop.permute.xlu0 %432
      %434 = vrot.lane.b32.xlu0 %v427, 90
      %v435 = vpop.permute.xlu0 %434
      %vm436 = vcmask 736256
      %v437 = vsel %vm436, %v429, %v431
      %v438 = vsel %vm436, %v431, %v433
      %v439 = vsel %vm436, %v433, %v435
      %443 = vst [vmem:[#allocation2 + $0x60] sm:$0xf] %v437
      %444 = vst [vmem:[#allocation2 + $0x68] sm:$0xf] %v438
      %445 = vst [vmem:[#allocation2 + $0x70] sm:$0xf] %v439
      %v446 = vld [vmem:[%s1] sm:$0xff]
      %v447 = vld [vmem:[%s1 + $0x8] sm:$0xff]
      %v448 = vld [vmem:[#allocation2] sm:$0xff]
      %v449 = vld [vmem:[#allocation2 + $0x8] sm:$0xff]
      %v450 = vld [vmem:[#allocation2 + $0x10] sm:$0xff]
      %v451 = vld [vmem:[#allocation2 + $0x18] sm:$0xff]
      %v452 = vld [vmem:[#allocation2 + $0x20] sm:$0xff]
      %v453 = vld [vmem:[#allocation2 + $0x28] sm:$0xff]
      %v454 = vld [vmem:[#allocation2 + $0x30] sm:$0xff]
      %v455 = vld [vmem:[#allocation2 + $0x38] sm:$0xff]
      %v456 = vld [vmem:[#allocation2 + $0x40] sm:$0xff]
      %v457 = vld [vmem:[#allocation2 + $0x48] sm:$0xff]
      %v458 = vld [vmem:[#allocation2 + $0x50] sm:$0xff]
      %v459 = vld [vmem:[#allocation2 + $0x58] sm:$0xff]
      %v460 = vld [vmem:[#allocation2 + $0x60] sm:$0xf]
      %v461 = vld [vmem:[#allocation2 + $0x68] sm:$0xf]
      %v462 = vld [vmem:[#allocation2 + $0x70] sm:$0xf]
      %v463 = vld [vmem:[%s2] sm:$0xff]
      %v464 = vld [vmem:[%s2 + $0x8] sm:$0xff]
      %466 = vset.pattern.permute.xlu0 0
      %467 = vperm.xlu0 %466, %v463
      %v468 = vpop.permute.xlu0 %467
      %471 = vset.pattern.permute.xlu0 0
      %472 = vperm.xlu0 %471, %v464
      %v473 = vpop.permute.xlu0 %472
      %vm475 = vcmask 293888
      %v477 = vsel %vm475, %v446, 0
      %v480 = vsel %vm475, %v447, 0
      %vm482 = vcmask 1043456
      %v484 = vsel %vm482, %v460, 0
      %v487 = vsel %vm482, %v461, 0
      %v490 = vsel %vm482, %v462, 0
      %492 = vmatpush.msra.mxu0 0.0
      %493 = vmatpush.msra.mxu0 0.0
      %494 = vmatpush.msra.mxu0 0.0
      %495 = vmatpush.msra.mxu0 0.0
      %496 = vmatpush.msra.mxu0 0.0
      %497 = vmatpush.msra.mxu0 0.0
      %498 = vmatpush.msra.mxu0 0.0
      %499 = vmatpush.msra.mxu0 0.0
      %500 = vmatpush.msra.mxu0 0.0
      %501 = vmatpush.msra.mxu0 0.0
      %502 = vmatpush.msra.mxu0 0.0
      %503 = vmatpush.msra.mxu0 %v484
      %504 = vmatpush.msra.mxu0 %v457
      %505 = vmatpush.msra.mxu0 %v454
      %506 = vmatpush.msra.mxu0 %v451
      %507 = vmatpush.msra.mxu0 %v448
      %508 = vmatmul.f32.gmra.mxu0 %v477
      %v509 = vpop.f32.mrf.mxu0
      %v510 = vadd.f32 %v468, %v509
      %511 = vmatmul.f32.gmra.mxu0 %v480
      %v512 = vpop.f32.mrf.mxu0
      %v513 = vadd.f32 %v473, %v512
      %514 = vdwg.mxu0
      %515 = vmatpush.msra.mxu0 0.0
      %516 = vmatpush.msra.mxu0 0.0
      %517 = vmatpush.msra.mxu0 0.0
      %518 = vmatpush.msra.mxu0 0.0
      %519 = vmatpush.msra.mxu0 0.0
      %520 = vmatpush.msra.mxu0 0.0
      %521 = vmatpush.msra.mxu0 0.0
      %522 = vmatpush.msra.mxu0 0.0
      %523 = vmatpush.msra.mxu0 0.0
      %524 = vmatpush.msra.mxu0 0.0
      %525 = vmatpush.msra.mxu0 0.0
      %526 = vmatpush.msra.mxu0 %v487
      %527 = vmatpush.msra.mxu0 %v458
      %528 = vmatpush.msra.mxu0 %v455
      %529 = vmatpush.msra.mxu0 %v452
      %530 = vmatpush.msra.mxu0 %v449
      %531 = vmatmul.f32.gmra.mxu0 %v477
      %v532 = vpop.f32.mrf.mxu0
      %v533 = vadd.f32 %v468, %v532
      %534 = vmatmul.f32.gmra.mxu0 %v480
      %v535 = vpop.f32.mrf.mxu0
      %v536 = vadd.f32 %v473, %v535
      %537 = vdwg.mxu0
      %538 = vmatpush.msra.mxu0 0.0
      %539 = vmatpush.msra.mxu0 0.0
      %540 = vmatpush.msra.mxu0 0.0
      %541 = vmatpush.msra.mxu0 0.0
      %542 = vmatpush.msra.mxu0 0.0
      %543 = vmatpush.msra.mxu0 0.0
      %544 = vmatpush.msra.mxu0 0.0
      %545 = vmatpush.msra.mxu0 0.0
      %546 = vmatpush.msra.mxu0 0.0
      %547 = vmatpush.msra.mxu0 0.0
      %548 = vmatpush.msra.mxu0 0.0
      %549 = vmatpush.msra.mxu0 %v490
      %550 = vmatpush.msra.mxu0 %v459
      %551 = vmatpush.msra.mxu0 %v456
      %552 = vmatpush.msra.mxu0 %v453
      %553 = vmatpush.msra.mxu0 %v450
      %554 = vmatmul.f32.gmra.mxu0 %v477
      %v555 = vpop.f32.mrf.mxu0
      %v556 = vadd.f32 %v468, %v555
      %557 = vmatmul.f32.gmra.mxu0 %v480
      %v558 = vpop.f32.mrf.mxu0
      %v559 = vadd.f32 %v473, %v558
      %560 = vdwg.mxu0
      %v561 = vxor.u32 %v513, 2147483648
      %v562 = vxor.u32 %v536, 2147483648
      %v563 = vxor.u32 %v559, 2147483648
      %v564 = vmul.f32 %v561, 1.442695
      %v565 = vpow.pop %v564
      %v566 = vmul.f32 %v562, 1.442695
      %v567 = vpow.pop %v566
      %v568 = vmul.f32 %v563, 1.442695
      %v569 = vpow.pop %v568
      %v570 = vadd.f32 %v565, 1.0
      %v571 = vadd.f32 %v567, 1.0
      %v572 = vadd.f32 %v569, 1.0
      %v573 = vrcp.pop %v570
      %v574 = vmul.f32 %v570, %v573
      %v575 = vsub.f32 1.0, %v574
      %v576 = vmul.f32 %v573, %v575
      %v577 = vadd.f32 %v573, %v576
      %vm578 = vweird.f32 %v570
      %vm579 = vweird.f32 %v573
      %vm580 = vmor %vm578, %vm579
      %v581 = vsel %vm580, %v573, %v577
      %v582 = vand.u32 2147483647, %v570
      %vm583 = vcmp.eq.f32.partialorder %v582, 8.507059e+37
      %v584 = vand.u32 %v570, 2147483648
      %v585 = vor.u32 1.1754944e-38, %v584
      %v586 = vsel %vm583, %v585, %v581
      %v587 = vmul.f32 1.0, %v586
      %v588 = vrcp.pop %v571
      %v589 = vmul.f32 %v571, %v588
      %v590 = vsub.f32 1.0, %v589
      %v591 = vmul.f32 %v588, %v590
      %v592 = vadd.f32 %v588, %v591
      %vm593 = vweird.f32 %v571
      %vm594 = vweird.f32 %v588
      %vm595 = vmor %vm593, %vm594
      %v596 = vsel %vm595, %v588, %v592
      %v597 = vand.u32 2147483647, %v571
      %vm598 = vcmp.eq.f32.partialorder %v597, 8.507059e+37
      %v599 = vand.u32 %v571, 2147483648
      %v600 = vor.u32 1.1754944e-38, %v599
      %v601 = vsel %vm598, %v600, %v596
      %v602 = vmul.f32 1.0, %v601
      %v603 = vrcp.pop %v572
      %v604 = vmul.f32 %v572, %v603
      %v605 = vsub.f32 1.0, %v604
      %v606 = vmul.f32 %v603, %v605
      %v607 = vadd.f32 %v603, %v606
      %vm608 = vweird.f32 %v572
      %vm609 = vweird.f32 %v603
      %vm610 = vmor %vm608, %vm609
      %v611 = vsel %vm610, %v603, %v607
      %v612 = vand.u32 2147483647, %v572
      %vm613 = vcmp.eq.f32.partialorder %v612, 8.507059e+37
      %v614 = vand.u32 %v572, 2147483648
      %v615 = vor.u32 1.1754944e-38, %v614
      %v616 = vsel %vm613, %v615, %v611
      %v617 = vmul.f32 1.0, %v616
      %v618 = vmul.f32 %v510, %v587
      %v619 = vmul.f32 %v533, %v602
      %v620 = vmul.f32 %v556, %v617
      %621 = vst [vmem:[%s192] sm:$0xff] %v618
      %622 = vst [vmem:[%s192 + $0x8] sm:$0xff] %v619
      %623 = vst [vmem:[%s192 + $0x10] sm:$0xff] %v620
      %s624 = smul.u32 3, %s19
      %p625 = scmp.lt.s32.totalorder %s18, 1
      %s626 = scalar_select %p625, %s18, 1
      %p627 = scmp.lt.s32.totalorder %s624, 2
      %s628 = scalar_select %p627, %s624, 2
      %s629 = smul.addr %s626, 3
      %s630 = sadd.s32 %s628, %s629
      %s631 = smul.addr %s630, 8
      %s632 = scalar_lea.vmem %s3, %s631
      // Predicated region
      $region33: #{gated_conv2d.1} parent=31 // pred_check
        %p633 = pneg %p114
      $region34: #{gated_conv2d.1} parent=31 // pred_check_branch
        %635 = sbr.rel (%p633) target = $region36
      $region35: #{gated_conv2d.1} parent=31 // pred_region
        %s636 = smul.u32 3, %s19
      $region36: #{gated_conv2d.1} parent=31 // pred_fallthru
        _
    $region32: #{gated_conv2d.1} parent=5 // pred_fallthru
      _
    %p637 = scmp.le.s32.totalorder 2, %s9
    // Predicated region
    $region37: #{gated_conv2d.1} parent=5 // pred_check
      %p638 = pneg %p637
    $region38: #{gated_conv2d.1} parent=5 // pred_check_branch
      %640 = sbr.rel (%p638) target = $region40
    $region39: #{gated_conv2d.1} parent=5 // pred_region
      %s641 = ssub.s32 %s9, 2
      // Predicated region
      $region41: #{gated_conv2d.1} parent=39 // pred_check
        %p642 = pneg %p120
      $region42: #{gated_conv2d.1} parent=39 // pred_check_branch
        %644 = sbr.rel (%p642) target = $region44
      $region43: #{gated_conv2d.1} parent=39 // pred_region
        %s645 = smul.u32 3, %s21
        %p646 = scmp.lt.s32.totalorder %s20, 1
        %s647 = scalar_select %p646, %s20, 1
        %p648 = scmp.lt.s32.totalorder %s645, 2
        %s649 = scalar_select %p648, %s645, 2
        %s650 = smul.addr %s647, 3
        %s651 = sadd.s32 %s649, %s650
        %s652 = smul.addr %s651, 8
        %s653 = scalar_lea.vmem %s3, %s652
      $region44: #{gated_conv2d.1} parent=39 // pred_fallthru
        _
    $region40: #{gated_conv2d.1} parent=5 // pred_fallthru
      _
  $region6: #{gated_conv2d.1} parent=0 // loop_footer
    %s13 = sadd.s32 1, %s9
  $region7: #{gated_conv2d.1} parent=0 // loop_footer_branch
    %8 = sbr.rel target = $region3
  $region8: #{gated_conv2d.1} parent=0 // loop_exit
    _

</llo_original>
